<compile_context>
chip_gen: v7x
topology: tpu7x:2x2x1
jax: 0.10.0
libtpu: 0.0.40
codegen_flags: <defaults>
</compile_context>

<pallas_src>
import functools

import numpy as np
import jax
import jax.numpy as jnp
from jax.experimental import pallas as pl
from jax.experimental.pallas import tpu as pltpu


# ---------------------------------------------------------------------------
# Model hyper-parameters (small synthetic configuration, use_default_fdim=False)
# ---------------------------------------------------------------------------
ATOM_FDIM = 24
BOND_FDIM = 8
CONCAT_FDIM = ATOM_FDIM + BOND_FDIM      # 32
ENC_HIDDEN = 32
DEPTH = 3
GLOBAL_FEATURES_SIZE = 16
FFN_HIDDEN = 32
FFN_LAYERS = 3
N_TASKS = 2                               # mode='regression' -> ffn_output = n_tasks

NUM_ATOMS = 10
NUM_BONDS = 20                            # directed bonds; +1 zero-pad row
NB1 = NUM_BONDS + 1
MAX_NB = 4                                # max incoming bonds per atom/bond
MOLECULES_UNBATCH_KEY = (6, 4)            # atoms per molecule (sums to NUM_ATOMS)
NUM_MOLS = len(MOLECULES_UNBATCH_KEY)

LANE = 128                                # lane-dense slab width
NM_PAD = 8                                # molecules padded to one sublane tile


def _align8(n):
    return ((n + 7) // 8) * 8


# ---- packed data-slab row layout (each section starts at a multiple of 8) ---
OFF_FINI = 0                                   # f_ini_atoms_bonds : NB1 rows
OFF_ATOM = _align8(OFF_FINI + NB1)             # atom_features     : NUM_ATOMS rows
OFF_GF   = _align8(OFF_ATOM + NUM_ATOMS)       # global_features   : NM_PAD rows
OFF_AMAP = _align8(OFF_GF + NM_PAD)            # A_map incidence   : NB1 rows
OFF_A2B  = _align8(OFF_AMAP + NB1)             # B_a2b incidence   : NUM_ATOMS rows
OFF_R    = _align8(OFF_A2B + NUM_ATOMS)        # mean-readout mat  : NM_PAD rows
DATA_ROWS = _align8(OFF_R + NM_PAD)

# ---- packed weight-slab row layout ------------------------------------------
WOFF_WI = 0                                                   # (CONCAT_FDIM, H)
WOFF_WH = _align8(WOFF_WI + CONCAT_FDIM)                      # (H, H)
WOFF_WO = _align8(WOFF_WH + ENC_HIDDEN)                       # concat [atom; msg]
WOFF_W1 = _align8(WOFF_WO + ATOM_FDIM + ENC_HIDDEN)           # concat [enc; gf]
WOFF_W2 = _align8(WOFF_W1 + ENC_HIDDEN + GLOBAL_FEATURES_SIZE)
WOFF_W3 = _align8(WOFF_W2 + FFN_HIDDEN)                       # padded to 128 lanes
W_ROWS  = _align8(WOFF_W3 + FFN_HIDDEN)

B_ROWS = 8                                                    # bias slab rows


# ---------------------------------------------------------------------------
# Pallas kernel: encoder (message passing + readout) + 3-layer FFN head
# ---------------------------------------------------------------------------
def _dmpnn_kernel(data_ref, w_ref, b_ref, out_ref):
    f32 = jnp.float32
    relu = lambda v: jnp.maximum(v, 0.0)
    dot = lambda a, b: jnp.dot(a, b, preferred_element_type=f32)

    # ---- hoisted loads from the packed slabs (static slices, read once) ----
    f_ini = data_ref[OFF_FINI:OFF_FINI + NB1, 0:CONCAT_FDIM]
    atoms = data_ref[OFF_ATOM:OFF_ATOM + NUM_ATOMS, 0:ATOM_FDIM]
    gfeat = data_ref[OFF_GF:OFF_GF + NM_PAD, 0:GLOBAL_FEATURES_SIZE]
    amap  = data_ref[OFF_AMAP:OFF_AMAP + NB1, 0:NB1]
    a2b   = data_ref[OFF_A2B:OFF_A2B + NUM_ATOMS, 0:NB1]
    rdo   = data_ref[OFF_R:OFF_R + NM_PAD, 0:NUM_ATOMS]

    w_i   = w_ref[WOFF_WI:WOFF_WI + CONCAT_FDIM, 0:ENC_HIDDEN]
    w_h   = w_ref[WOFF_WH:WOFF_WH + ENC_HIDDEN, 0:ENC_HIDDEN]
    w_o_a = w_ref[WOFF_WO:WOFF_WO + ATOM_FDIM, 0:ENC_HIDDEN]
    w_o_m = w_ref[WOFF_WO + ATOM_FDIM:
                  WOFF_WO + ATOM_FDIM + ENC_HIDDEN, 0:ENC_HIDDEN]
    w1_e  = w_ref[WOFF_W1:WOFF_W1 + ENC_HIDDEN, 0:FFN_HIDDEN]
    w1_g  = w_ref[WOFF_W1 + ENC_HIDDEN:
                  WOFF_W1 + ENC_HIDDEN + GLOBAL_FEATURES_SIZE, 0:FFN_HIDDEN]
    w2    = w_ref[WOFF_W2:WOFF_W2 + FFN_HIDDEN, 0:FFN_HIDDEN]
    w3    = w_ref[WOFF_W3:WOFF_W3 + FFN_HIDDEN, :]          # (H, 128) zero-padded

    b_o = b_ref[0:1, 0:ENC_HIDDEN]
    b1  = b_ref[1:2, 0:FFN_HIDDEN]
    b2  = b_ref[2:3, 0:FFN_HIDDEN]
    b3  = b_ref[3:4, :]                                      # (1, 128) zero-padded

    # W_i + activation : (NB+1, H)
    inp = dot(f_ini, w_i)
    message = relu(inp)

    # message passing steps; gather+sum aggregation expressed as MXU matmul
    for _ in range(1, DEPTH):
        message = relu(inp + dot(dot(amap, message), w_h))

    # messages -> atoms; W_o (split matmul == concat([atom_feat, m2a]) @ W_o)
    m2a = dot(a2b, message)                                  # (NA, H)
    atoms_h = relu(dot(atoms, w_o_a) + dot(m2a, w_o_m) + b_o)

    # per-molecule mean readout as matmul (rows padded to 8 -> zero readouts)
    readout = dot(rdo, atoms_h)                              # (NM_PAD, H)

    # FFN: first layer consumes concat([readout, global_features]) via split matmul
    x = relu(dot(readout, w1_e) + dot(gfeat, w1_g) + b1)
    x = relu(dot(x, w2) + b2)
    out_ref[...] = dot(x, w3) + b3                           # lane-dense (8, 128) store


# ---------------------------------------------------------------------------
# Jitted wrapper: incidence construction + slab packing + single pallas_call
# ---------------------------------------------------------------------------
@functools.partial(jax.jit, static_argnames=("molecules_unbatch_key",))
def dmpnn_forward_pallas(atom_features, f_ini_atoms_bonds, atom_to_incoming_bonds,
                         mapping, global_features, molecules_unbatch_key, params):
    def incidence(idx, num_cols):
        # torch-style fancy indexing: -1 wraps to the last (zero pad) row.
        idxn = jnp.where(idx < 0, idx + num_cols, idx)
        return jax.nn.one_hot(idxn, num_cols, dtype=jnp.float32).sum(axis=1)

    A_map = incidence(mapping, NB1)                       # (NB+1, NB+1)
    B_a2b = incidence(atom_to_incoming_bonds, NB1)        # (NA,   NB+1)

    # mean-aggregation readout matrix from molecules_unbatch_key (static tuple)
    counts = np.asarray(molecules_unbatch_key, dtype=np.int32)
    seg = np.repeat(np.arange(len(counts)), counts)       # (NA,)
    R = (seg[None, :] == np.arange(len(counts))[:, None]).astype(np.float32)
    R = R / counts[:, None].astype(np.float32)            # (NM, NA), constant

    # ---- pack everything into 3 lane-dense slabs (3 DMAs instead of 18) ----
    data = jnp.zeros((DATA_ROWS, LANE), jnp.float32)
    data = data.at[OFF_FINI:OFF_FINI + NB1, 0:CONCAT_FDIM].set(f_ini_atoms_bonds)
    data = data.at[OFF_ATOM:OFF_ATOM + NUM_ATOMS, 0:ATOM_FDIM].set(atom_features)
    data = data.at[OFF_GF:OFF_GF + NUM_MOLS, 0:GLOBAL_FEATURES_SIZE].set(global_features)
    data = data.at[OFF_AMAP:OFF_AMAP + NB1, 0:NB1].set(A_map)
    data = data.at[OFF_A2B:OFF_A2B + NUM_ATOMS, 0:NB1].set(B_a2b)
    data = data.at[OFF_R:OFF_R + NUM_MOLS, 0:NUM_ATOMS].set(jnp.asarray(R))

    w = jnp.zeros((W_ROWS, LANE), jnp.float32)
    w = w.at[WOFF_WI:WOFF_WI + CONCAT_FDIM, 0:ENC_HIDDEN].set(params['W_i'])
    w = w.at[WOFF_WH:WOFF_WH + ENC_HIDDEN, 0:ENC_HIDDEN].set(params['W_h'])
    w = w.at[WOFF_WO:WOFF_WO + ATOM_FDIM, 0:ENC_HIDDEN].set(params['W_o_atom'])
    w = w.at[WOFF_WO + ATOM_FDIM:
             WOFF_WO + ATOM_FDIM + ENC_HIDDEN, 0:ENC_HIDDEN].set(params['W_o_msg'])
    w = w.at[WOFF_W1:WOFF_W1 + ENC_HIDDEN, 0:FFN_HIDDEN].set(params['W1_enc'])
    w = w.at[WOFF_W1 + ENC_HIDDEN:
             WOFF_W1 + ENC_HIDDEN + GLOBAL_FEATURES_SIZE, 0:FFN_HIDDEN].set(params['W1_gf'])
    w = w.at[WOFF_W2:WOFF_W2 + FFN_HIDDEN, 0:FFN_HIDDEN].set(params['W2'])
    w = w.at[WOFF_W3:WOFF_W3 + FFN_HIDDEN, 0:N_TASKS].set(params['W3'])   # pad -> 128 lanes

    b = jnp.zeros((B_ROWS, LANE), jnp.float32)
    b = b.at[0:1, 0:ENC_HIDDEN].set(params['b_o'])
    b = b.at[1:2, 0:FFN_HIDDEN].set(params['b1'])
    b = b.at[2:3, 0:FFN_HIDDEN].set(params['b2'])
    b = b.at[3:4, 0:N_TASKS].set(params['b3'])

    out_pad = pl.pallas_call(
        _dmpnn_kernel,
        out_shape=jax.ShapeDtypeStruct((NM_PAD, LANE), jnp.float32),
        in_specs=[pl.BlockSpec(memory_space=pltpu.MemorySpace.VMEM)] * 3,
        out_specs=pl.BlockSpec(memory_space=pltpu.MemorySpace.VMEM),
        compiler_params=pltpu.CompilerParams(vmem_limit_bytes=64 * 1024 * 1024),
    )(data, w, b)

    return out_pad[:NUM_MOLS, :N_TASKS]


# ---------------------------------------------------------------------------
# Pure-JAX reference (mirrors torch semantics directly: gather + concat)
# ---------------------------------------------------------------------------
def dmpnn_forward_ref(atom_features, f_ini_atoms_bonds, atom_to_incoming_bonds,
                      mapping, global_features, molecules_unbatch_key, params):
    nb1 = f_ini_atoms_bonds.shape[0]
    relu = lambda v: jnp.maximum(v, 0.0)
    map_n = jnp.where(mapping < 0, mapping + nb1, mapping)
    a2b_n = jnp.where(atom_to_incoming_bonds < 0,
                      atom_to_incoming_bonds + nb1, atom_to_incoming_bonds)

    inp = f_ini_atoms_bonds @ params['W_i']
    message = relu(inp)
    for _ in range(1, DEPTH):
        msum = jnp.take(message, map_n, axis=0).sum(axis=1)
        message = relu(inp + msum @ params['W_h'])

    m2a = jnp.take(message, a2b_n, axis=0).sum(axis=1)
    W_o = jnp.concatenate([params['W_o_atom'], params['W_o_msg']], axis=0)
    atoms_h = relu(jnp.concatenate([atom_features, m2a], axis=1) @ W_o
                   + params['b_o'])

    mols, start = [], 0
    for n in molecules_unbatch_key:
        mols.append(atoms_h[start:start + n].sum(axis=0) / n)
        start += n
    readout = jnp.stack(mols, axis=0)

    enc = jnp.concatenate([readout, global_features], axis=1)
    W1 = jnp.concatenate([params['W1_enc'], params['W1_gf']], axis=0)
    x = relu(enc @ W1 + params['b1'])
    x = relu(x @ params['W2'] + params['b2'])
    return x @ params['W3'] + params['b3']


# ---------------------------------------------------------------------------
# Main
# ---------------------------------------------------------------------------
if __name__ == "__main__":
    key = jax.random.PRNGKey(0)
    ks = jax.random.split(key, 16)

    # ---- synthetic graph inputs ------------------------------------------
    atom_features = jax.random.normal(ks[0], (NUM_ATOMS, ATOM_FDIM), jnp.float32)
    f_ini = jax.random.normal(ks[1], (NUM_BONDS + 1, CONCAT_FDIM), jnp.float32)
    f_ini = f_ini.at[-1].set(0.0)                       # zero pad row (index -1)
    mapping = jax.random.randint(ks[2], (NUM_BONDS + 1, MAX_NB), -1, NUM_BONDS,
                                 dtype=jnp.int32)
    mapping = mapping.at[-1].set(-1)                    # pad bond maps to pad row
    atom_to_incoming_bonds = jax.random.randint(
        ks[3], (NUM_ATOMS, MAX_NB), -1, NUM_BONDS, dtype=jnp.int32)
    global_features = jax.random.normal(
        ks[4], (NUM_MOLS, GLOBAL_FEATURES_SIZE), jnp.float32)

    # ---- deterministic parameters (bias=False for W_i / W_h, like module) --
    s = 0.1
    params = {
        'W_i':      s * jax.random.normal(ks[5],  (CONCAT_FDIM, ENC_HIDDEN), jnp.float32),
        'W_h':      s * jax.random.normal(ks[6],  (ENC_HIDDEN, ENC_HIDDEN), jnp.float32),
        'W_o_atom': s * jax.random.normal(ks[7],  (ATOM_FDIM, ENC_HIDDEN), jnp.float32),
        'W_o_msg':  s * jax.random.normal(ks[8],  (ENC_HIDDEN, ENC_HIDDEN), jnp.float32),
        'b_o':      s * jax.random.normal(ks[9],  (1, ENC_HIDDEN), jnp.float32),
        'W1_enc':   s * jax.random.normal(ks[10], (ENC_HIDDEN, FFN_HIDDEN), jnp.float32),
        'W1_gf':    s * jax.random.normal(ks[11], (GLOBAL_FEATURES_SIZE, FFN_HIDDEN), jnp.float32),
        'b1':       s * jax.random.normal(ks[12], (1, FFN_HIDDEN), jnp.float32),
        'W2':       s * jax.random.normal(ks[13], (FFN_HIDDEN, FFN_HIDDEN), jnp.float32),
        'b2':       s * jax.random.normal(ks[14], (1, FFN_HIDDEN), jnp.float32),
        'W3':       s * jax.random.normal(ks[15], (FFN_HIDDEN, N_TASKS), jnp.float32),
        'b3':       jnp.zeros((1, N_TASKS), jnp.float32),
    }
    # enc_dropout_p = ffn_dropout_p = 0.0 -> dropout layers are identity (omitted).
    # mode='regression' -> final_output is the raw FFN output, shape (NUM_MOLS, N_TASKS).

    out = dmpnn_forward_pallas(atom_features, f_ini, atom_to_incoming_bonds,
                               mapping, global_features,
                               MOLECULES_UNBATCH_KEY, params)
    out = jax.block_until_ready(out)

    ref = dmpnn_forward_ref(atom_features, f_ini, atom_to_incoming_bonds,
                            mapping, global_features,
                            MOLECULES_UNBATCH_KEY, params)
    np.testing.assert_allclose(np.asarray(out), np.asarray(ref),
                               rtol=1e-3, atol=1e-3)

    print("KERNEL_OK")
</pallas_src>

<mosaic_0001>
module attributes {stable_mosaic.version = 11 : i64} {
  func.func @_dmpnn_kernel(%arg0: memref<96x128xf32, #tpu.memory_space<vmem>>, %arg1: memref<232x128xf32, #tpu.memory_space<vmem>>, %arg2: memref<8x128xf32, #tpu.memory_space<vmem>>, %arg3: memref<8x128xf32, #tpu.memory_space<vmem>>) attributes {dimension_semantics = [], scalar_prefetch = 0 : i64, scratch_operands = 0 : i64, tpu.core_type = #tpu.core_type<tc>} {
    %c0 = arith.constant 0 : index
    %c0_0 = arith.constant 0 : index
    %0 = vector.load %arg0[%c0, %c0_0] : memref<96x128xf32, #tpu.memory_space<vmem>>, vector<21x32xf32>
    %c24 = arith.constant 24 : index
    %c0_1 = arith.constant 0 : index
    %1 = vector.load %arg0[%c24, %c0_1] : memref<96x128xf32, #tpu.memory_space<vmem>>, vector<10x24xf32>
    %c40 = arith.constant 40 : index
    %c0_2 = arith.constant 0 : index
    %2 = vector.load %arg0[%c40, %c0_2] : memref<96x128xf32, #tpu.memory_space<vmem>>, vector<8x16xf32>
    %c48 = arith.constant 48 : index
    %c0_3 = arith.constant 0 : index
    %3 = vector.load %arg0[%c48, %c0_3] : memref<96x128xf32, #tpu.memory_space<vmem>>, vector<21x21xf32>
    %c72 = arith.constant 72 : index
    %c0_4 = arith.constant 0 : index
    %4 = vector.load %arg0[%c72, %c0_4] : memref<96x128xf32, #tpu.memory_space<vmem>>, vector<10x21xf32>
    %c88 = arith.constant 88 : index
    %c0_5 = arith.constant 0 : index
    %5 = vector.load %arg0[%c88, %c0_5] : memref<96x128xf32, #tpu.memory_space<vmem>>, vector<8x10xf32>
    %c0_6 = arith.constant 0 : index
    %c0_7 = arith.constant 0 : index
    %6 = vector.load %arg1[%c0_6, %c0_7] : memref<232x128xf32, #tpu.memory_space<vmem>>, vector<32x32xf32>
    %c32 = arith.constant 32 : index
    %c0_8 = arith.constant 0 : index
    %7 = vector.load %arg1[%c32, %c0_8] : memref<232x128xf32, #tpu.memory_space<vmem>>, vector<32x32xf32>
    %c64 = arith.constant 64 : index
    %c0_9 = arith.constant 0 : index
    %8 = vector.load %arg1[%c64, %c0_9] : memref<232x128xf32, #tpu.memory_space<vmem>>, vector<24x32xf32>
    %c88_10 = arith.constant 88 : index
    %c0_11 = arith.constant 0 : index
    %9 = vector.load %arg1[%c88_10, %c0_11] : memref<232x128xf32, #tpu.memory_space<vmem>>, vector<32x32xf32>
    %c120 = arith.constant 120 : index
    %c0_12 = arith.constant 0 : index
    %10 = vector.load %arg1[%c120, %c0_12] : memref<232x128xf32, #tpu.memory_space<vmem>>, vector<32x32xf32>
    %c152 = arith.constant 152 : index
    %c0_13 = arith.constant 0 : index
    %11 = vector.load %arg1[%c152, %c0_13] : memref<232x128xf32, #tpu.memory_space<vmem>>, vector<16x32xf32>
    %c168 = arith.constant 168 : index
    %c0_14 = arith.constant 0 : index
    %12 = vector.load %arg1[%c168, %c0_14] : memref<232x128xf32, #tpu.memory_space<vmem>>, vector<32x32xf32>
    %c200 = arith.constant 200 : index
    %c0_15 = arith.constant 0 : index
    %13 = vector.load %arg1[%c200, %c0_15] : memref<232x128xf32, #tpu.memory_space<vmem>>, vector<32x128xf32>
    %c0_16 = arith.constant 0 : index
    %c0_17 = arith.constant 0 : index
    %14 = vector.load %arg2[%c0_16, %c0_17] : memref<8x128xf32, #tpu.memory_space<vmem>>, vector<1x32xf32>
    %c1 = arith.constant 1 : index
    %c0_18 = arith.constant 0 : index
    %15 = vector.load %arg2[%c1, %c0_18] : memref<8x128xf32, #tpu.memory_space<vmem>>, vector<1x32xf32>
    %c2 = arith.constant 2 : index
    %c0_19 = arith.constant 0 : index
    %16 = vector.load %arg2[%c2, %c0_19] : memref<8x128xf32, #tpu.memory_space<vmem>>, vector<1x32xf32>
    %c3 = arith.constant 3 : index
    %c0_20 = arith.constant 0 : index
    %17 = vector.load %arg2[%c3, %c0_20] : memref<8x128xf32, #tpu.memory_space<vmem>>, vector<1x128xf32>
    %cst = arith.constant dense<0.000000e+00> : vector<21x32xf32>
    %18 = tpu.matmul %0, %6, %cst {dimension_numbers = #tpu.dot_dimension_numbers<[1], [0], [0], [1], [0, 0, 1, 1], [], []>} : vector<21x32xf32>, vector<32x32xf32>, vector<21x32xf32> -> vector<21x32xf32>
    %cst_21 = arith.constant 0.000000e+00 : f32
    %19 = vector.broadcast %cst_21 : f32 to vector<21x32xf32>
    %20 = arith.maximumf %18, %19 : vector<21x32xf32>
    %cst_22 = arith.constant dense<0.000000e+00> : vector<21x32xf32>
    %21 = tpu.matmul %3, %20, %cst_22 {dimension_numbers = #tpu.dot_dimension_numbers<[1], [0], [0], [1], [0, 0, 1, 1], [], []>} : vector<21x21xf32>, vector<21x32xf32>, vector<21x32xf32> -> vector<21x32xf32>
    %cst_23 = arith.constant dense<0.000000e+00> : vector<21x32xf32>
    %22 = tpu.matmul %21, %7, %cst_23 {dimension_numbers = #tpu.dot_dimension_numbers<[1], [0], [0], [1], [0, 0, 1, 1], [], []>} : vector<21x32xf32>, vector<32x32xf32>, vector<21x32xf32> -> vector<21x32xf32>
    %23 = arith.addf %18, %22 : vector<21x32xf32>
    %cst_24 = arith.constant 0.000000e+00 : f32
    %24 = vector.broadcast %cst_24 : f32 to vector<21x32xf32>
    %25 = arith.maximumf %23, %24 : vector<21x32xf32>
    %cst_25 = arith.constant dense<0.000000e+00> : vector<21x32xf32>
    %26 = tpu.matmul %3, %25, %cst_25 {dimension_numbers = #tpu.dot_dimension_numbers<[1], [0], [0], [1], [0, 0, 1, 1], [], []>} : vector<21x21xf32>, vector<21x32xf32>, vector<21x32xf32> -> vector<21x32xf32>
    %cst_26 = arith.constant dense<0.000000e+00> : vector<21x32xf32>
    %27 = tpu.matmul %26, %7, %cst_26 {dimension_numbers = #tpu.dot_dimension_numbers<[1], [0], [0], [1], [0, 0, 1, 1], [], []>} : vector<21x32xf32>, vector<32x32xf32>, vector<21x32xf32> -> vector<21x32xf32>
    %28 = arith.addf %18, %27 : vector<21x32xf32>
    %cst_27 = arith.constant 0.000000e+00 : f32
    %29 = vector.broadcast %cst_27 : f32 to vector<21x32xf32>
    %30 = arith.maximumf %28, %29 : vector<21x32xf32>
    %cst_28 = arith.constant dense<0.000000e+00> : vector<10x32xf32>
    %31 = tpu.matmul %4, %30, %cst_28 {dimension_numbers = #tpu.dot_dimension_numbers<[1], [0], [0], [1], [0, 0, 1, 1], [], []>} : vector<10x21xf32>, vector<21x32xf32>, vector<10x32xf32> -> vector<10x32xf32>
    %cst_29 = arith.constant dense<0.000000e+00> : vector<10x32xf32>
    %32 = tpu.matmul %1, %8, %cst_29 {dimension_numbers = #tpu.dot_dimension_numbers<[1], [0], [0], [1], [0, 0, 1, 1], [], []>} : vector<10x24xf32>, vector<24x32xf32>, vector<10x32xf32> -> vector<10x32xf32>
    %cst_30 = arith.constant dense<0.000000e+00> : vector<10x32xf32>
    %33 = tpu.matmul %31, %9, %cst_30 {dimension_numbers = #tpu.dot_dimension_numbers<[1], [0], [0], [1], [0, 0, 1, 1], [], []>} : vector<10x32xf32>, vector<32x32xf32>, vector<10x32xf32> -> vector<10x32xf32>
    %34 = arith.addf %32, %33 : vector<10x32xf32>
    %35 = vector.broadcast %14 : vector<1x32xf32> to vector<10x32xf32>
    %36 = arith.addf %34, %35 : vector<10x32xf32>
    %cst_31 = arith.constant 0.000000e+00 : f32
    %37 = vector.broadcast %cst_31 : f32 to vector<10x32xf32>
    %38 = arith.maximumf %36, %37 : vector<10x32xf32>
    %cst_32 = arith.constant dense<0.000000e+00> : vector<8x32xf32>
    %39 = tpu.matmul %5, %38, %cst_32 {dimension_numbers = #tpu.dot_dimension_numbers<[1], [0], [0], [1], [0, 0, 1, 1], [], []>} : vector<8x10xf32>, vector<10x32xf32>, vector<8x32xf32> -> vector<8x32xf32>
    %cst_33 = arith.constant dense<0.000000e+00> : vector<8x32xf32>
    %40 = tpu.matmul %39, %10, %cst_33 {dimension_numbers = #tpu.dot_dimension_numbers<[1], [0], [0], [1], [0, 0, 1, 1], [], []>} : vector<8x32xf32>, vector<32x32xf32>, vector<8x32xf32> -> vector<8x32xf32>
    %cst_34 = arith.constant dense<0.000000e+00> : vector<8x32xf32>
    %41 = tpu.matmul %2, %11, %cst_34 {dimension_numbers = #tpu.dot_dimension_numbers<[1], [0], [0], [1], [0, 0, 1, 1], [], []>} : vector<8x16xf32>, vector<16x32xf32>, vector<8x32xf32> -> vector<8x32xf32>
    %42 = arith.addf %40, %41 : vector<8x32xf32>
    %43 = vector.broadcast %15 : vector<1x32xf32> to vector<8x32xf32>
    %44 = arith.addf %42, %43 : vector<8x32xf32>
    %cst_35 = arith.constant 0.000000e+00 : f32
    %45 = vector.broadcast %cst_35 : f32 to vector<8x32xf32>
    %46 = arith.maximumf %44, %45 : vector<8x32xf32>
    %cst_36 = arith.constant dense<0.000000e+00> : vector<8x32xf32>
    %47 = tpu.matmul %46, %12, %cst_36 {dimension_numbers = #tpu.dot_dimension_numbers<[1], [0], [0], [1], [0, 0, 1, 1], [], []>} : vector<8x32xf32>, vector<32x32xf32>, vector<8x32xf32> -> vector<8x32xf32>
    %48 = vector.broadcast %16 : vector<1x32xf32> to vector<8x32xf32>
    %49 = arith.addf %47, %48 : vector<8x32xf32>
    %cst_37 = arith.constant 0.000000e+00 : f32
    %50 = vector.broadcast %cst_37 : f32 to vector<8x32xf32>
    %51 = arith.maximumf %49, %50 : vector<8x32xf32>
    %cst_38 = arith.constant dense<0.000000e+00> : vector<8x128xf32>
    %52 = tpu.matmul %51, %13, %cst_38 {dimension_numbers = #tpu.dot_dimension_numbers<[1], [0], [0], [1], [0, 0, 1, 1], [], []>} : vector<8x32xf32>, vector<32x128xf32>, vector<8x128xf32> -> vector<8x128xf32>
    %53 = vector.broadcast %17 : vector<1x128xf32> to vector<8x128xf32>
    %54 = arith.addf %52, %53 : vector<8x128xf32>
    %c0_39 = arith.constant 0 : index
    %c0_40 = arith.constant 0 : index
    %55 = vector.load %arg3[%c0_39, %c0_40] : memref<8x128xf32, #tpu.memory_space<vmem>>, vector<8x128xf32>
    tpu.vector_store %arg3[%c0_39, %c0_40], %54 {strides = array<i32>} : memref<8x128xf32, #tpu.memory_space<vmem>>, vector<8x128xf32>,
    return
  }
}

</mosaic_0001>

<llo_original>
// kernel: dmpnn_forward_pallas.1
$region0: #{dmpnn_forward_pallas.1}
  #allocation0 [shape = 'u32[]', space=smem, size = 0x4, offset = 0x4, fixed_abs, tag = 'smem constant byte address 0x4 - core index']
  #allocation1 [shape = 'u32[144,128]{1,0:T(1,128)}', space=vmem, size = 0x12000, scoped, tag = 'internal scratch']
  %s0 = inlined_call_operand.hbm [shape: f32[96,128], index: 0, kind: input, shape index: {}]
  %s1 = inlined_call_operand.hbm [shape: f32[232,128], index: 1, kind: input, shape index: {}]
  %s2 = inlined_call_operand.hbm [shape: f32[8,128], index: 2, kind: input, shape index: {}]
  %s3 = inlined_call_operand.hbm [shape: f32[8,128], index: 3, kind: output, shape index: {}]
  %s4 = sld [smem:[#allocation0]]
  $region34: #{dmpnn_forward_pallas.1} parent=0
    _
  %s6 = ssub.s32 1, %s4
  %s7 = scalar_select 0, %s6, %s4
  $region1: #{dmpnn_forward_pallas.1} parent=0
    #allocation2 [shape = 'u8[49152]{0}', space=vmem, size = 0xc000, scoped, tag = 'input window, operand 0, single buffered']
    #allocation3 [shape = 's32[1]{0}', space=sflag, size = 0x4, scoped, tag = 'scoped memory for dmpnn_forward_pallas.1']
    #allocation4 [shape = 's32[1]{0}', space=sflag, size = 0x4, scoped, tag = 'scoped memory for dmpnn_forward_pallas.1']
    #allocation5 [shape = 'u8[118784]{0}', space=vmem, size = 0x1d000, scoped, tag = 'input window, operand 1, single buffered']
    #allocation6 [shape = 's32[1]{0}', space=sflag, size = 0x4, scoped, tag = 'scoped memory for dmpnn_forward_pallas.1']
    #allocation7 [shape = 'u8[4096]{0}', space=vmem, size = 0x1000, scoped, tag = 'input window, operand 2, single buffered']
    #allocation8 [shape = 'u8[4096]{0}', space=vmem, size = 0x1000, scoped, tag = 'output window, operand 0, single buffered']
    %8 = vsyncpa [#allocation3], 0
    %9 = vsyncpa [#allocation6], 0
    %10 = vsyncpa [#allocation4], 0
    // Predicated region
    $region2: #{dmpnn_forward_pallas.1} parent=1 // pred_check
      _
    $region3: #{dmpnn_forward_pallas.1} parent=1 // pred_check_branch
      %12 = sbr.rel (0) target = $region5
    $region4: #{dmpnn_forward_pallas.1} parent=1 // pred_region
      %s14 = ssub.s32 1536, 1536
      %15 = vsyncadd [#allocation3], %s14
      %s16 = sshll.u32 [#allocation2], 4
      %s17 = int_to_ptr.vmem [resolvable:$true] %s16
      %22 = dma.hbm_to_vmem [thread:$0]  %s0, 1536, %s17, [#allocation3], 128, 128, 8
    $region5: #{dmpnn_forward_pallas.1} parent=1 // pred_fallthru
      _
    // Predicated region
    $region6: #{dmpnn_forward_pallas.1} parent=1 // pred_check
      _
    $region7: #{dmpnn_forward_pallas.1} parent=1 // pred_check_branch
      %24 = sbr.rel (0) target = $region9
    $region8: #{dmpnn_forward_pallas.1} parent=1 // pred_region
      %s26 = ssub.s32 3712, 3712
      %27 = vsyncadd [#allocation6], %s26
      %s28 = sshll.u32 [#allocation5], 4
      %s29 = int_to_ptr.vmem [resolvable:$true] %s28
      %34 = dma.hbm_to_vmem [thread:$0]  %s1, 3712, %s29, [#allocation6], 128, 128, 8
    $region9: #{dmpnn_forward_pallas.1} parent=1 // pred_fallthru
      _
    // Predicated region
    $region10: #{dmpnn_forward_pallas.1} parent=1 // pred_check
      _
    $region11: #{dmpnn_forward_pallas.1} parent=1 // pred_check_branch
      %36 = sbr.rel (0) target = $region13
    $region12: #{dmpnn_forward_pallas.1} parent=1 // pred_region
      %s38 = ssub.s32 128, 128
      %39 = vsyncadd [#allocation6], %s38
      %s41 = sshll.u32 [#allocation7], 4
      %s42 = int_to_ptr.vmem [resolvable:$true] %s41
      %44 = dma.hbm_to_vmem [thread:$0]  %s2, 128, %s42, [#allocation6]
    $region13: #{dmpnn_forward_pallas.1} parent=1 // pred_fallthru
      _
    // Predicated region
    $region14: #{dmpnn_forward_pallas.1} parent=1 // pred_check
      _
    $region15: #{dmpnn_forward_pallas.1} parent=1 // pred_check_branch
      %46 = sbr.rel (0) target = $region17
    $region16: #{dmpnn_forward_pallas.1} parent=1 // pred_region
      %47 = dma.done [#allocation3], 1536
    $region17: #{dmpnn_forward_pallas.1} parent=1 // pred_fallthru
      _
    // Predicated region
    $region18: #{dmpnn_forward_pallas.1} parent=1 // pred_check
      _
    $region19: #{dmpnn_forward_pallas.1} parent=1 // pred_check_branch
      %49 = sbr.rel (0) target = $region21
    $region20: #{dmpnn_forward_pallas.1} parent=1 // pred_region
      %50 = dma.done [#allocation6], 3712
    $region21: #{dmpnn_forward_pallas.1} parent=1 // pred_fallthru
      _
    // Predicated region
    $region22: #{dmpnn_forward_pallas.1} parent=1 // pred_check
      _
    $region23: #{dmpnn_forward_pallas.1} parent=1 // pred_check_branch
      %52 = sbr.rel (0) target = $region25
    $region24: #{dmpnn_forward_pallas.1} parent=1 // pred_region
      %53 = dma.done [#allocation6], 128
    $region25: #{dmpnn_forward_pallas.1} parent=1 // pred_fallthru
      _
    %v54 = vld [vmem:[#allocation2] sm:$0xff]
    %v55 = vld [vmem:[#allocation2 + $0x8] sm:$0xff]
    %v56 = vld [vmem:[#allocation2 + $0x10] sm:$0x1f]
    %v57 = vld [vmem:[#allocation2 + $0x18] sm:$0xff]
    %v58 = vld [vmem:[#allocation2 + $0x20] sm:$0x3]
    %v59 = vld [vmem:[#allocation2 + $0x28] sm:$0xff]
    %v60 = vld [vmem:[#allocation2 + $0x30] sm:$0xff]
    %v61 = vld [vmem:[#allocation2 + $0x38] sm:$0xff]
    %v62 = vld [vmem:[#allocation2 + $0x40] sm:$0x1f]
    %v63 = vld [vmem:[#allocation2 + $0x48] sm:$0xff]
    %v64 = vld [vmem:[#allocation2 + $0x50] sm:$0x3]
    %v65 = vld [vmem:[#allocation2 + $0x58] sm:$0xff]
    %v66 = vld [vmem:[#allocation5] sm:$0xff]
    %v67 = vld [vmem:[#allocation5 + $0x8] sm:$0xff]
    %v68 = vld [vmem:[#allocation5 + $0x10] sm:$0xff]
    %v69 = vld [vmem:[#allocation5 + $0x18] sm:$0xff]
    %v70 = vld [vmem:[#allocation5 + $0x20] sm:$0xff]
    %v71 = vld [vmem:[#allocation5 + $0x28] sm:$0xff]
    %v72 = vld [vmem:[#allocation5 + $0x30] sm:$0xff]
    %v73 = vld [vmem:[#allocation5 + $0x38] sm:$0xff]
    %v74 = vld [vmem:[#allocation5 + $0x40] sm:$0xff]
    %v75 = vld [vmem:[#allocation5 + $0x48] sm:$0xff]
    %v76 = vld [vmem:[#allocation5 + $0x50] sm:$0xff]
    %v77 = vld [vmem:[#allocation5 + $0x58] sm:$0xff]
    %v78 = vld [vmem:[#allocation5 + $0x60] sm:$0xff]
    %v79 = vld [vmem:[#allocation5 + $0x68] sm:$0xff]
    %v80 = vld [vmem:[#allocation5 + $0x70] sm:$0xff]
    %v81 = vld [vmem:[#allocation5 + $0x78] sm:$0xff]
    %v82 = vld [vmem:[#allocation5 + $0x80] sm:$0xff]
    %v83 = vld [vmem:[#allocation5 + $0x88] sm:$0xff]
    %v84 = vld [vmem:[#allocation5 + $0x90] sm:$0xff]
    %v85 = vld [vmem:[#allocation5 + $0x98] sm:$0xff]
    %v86 = vld [vmem:[#allocation5 + $0xa0] sm:$0xff]
    %v87 = vld [vmem:[#allocation5 + $0xa8] sm:$0xff]
    %v88 = vld [vmem:[#allocation5 + $0xb0] sm:$0xff]
    %v89 = vld [vmem:[#allocation5 + $0xb8] sm:$0xff]
    %v90 = vld [vmem:[#allocation5 + $0xc0] sm:$0xff]
    %v91 = vld [vmem:[#allocation5 + $0xc8] sm:$0xff]
    %v92 = vld [vmem:[#allocation5 + $0xd0] sm:$0xff]
    %v93 = vld [vmem:[#allocation5 + $0xd8] sm:$0xff]
    %v94 = vld [vmem:[#allocation5 + $0xe0] sm:$0xff]
    %v95 = vld [vmem:[#allocation7] sm:$0x1]
    %v96 = vld [vmem:[#allocation7 + $0x1] sm:$0x1]
    %v97 = vld [vmem:[#allocation7 + $0x2] sm:$0x1]
    %v98 = vld [vmem:[#allocation7 + $0x3] sm:$0x1]
    %vm99 = vcmask 261120
    %v101 = vsel %vm99, %v54, 0
    %v104 = vsel %vm99, %v55, 0
    %v107 = vsel %vm99, %v56, 0
    %109 = vmatprep.subr.mxu0 0.0
    %110 = vmatpush1.msra.mxu0 %v66
    %111 = vmatprep.subr.mxu0 0.0
    %112 = vmatpush1.msra.mxu0 %v67
    %113 = vmatprep.subr.mxu0 0.0
    %114 = vmatpush1.msra.mxu0 %v68
    %115 = vmatprep.subr.mxu0 0.0
    %116 = vmatpush1.msra.mxu0 %v69
    %117 = vmatprep.subr.mxu0 0.0
    %118 = vmatpush1.msra.mxu0 0.0
    %119 = vmatprep.subr.mxu0 0.0
    %120 = vmatpush1.msra.mxu0 0.0
    %121 = vmatprep.subr.mxu0 0.0
    %122 = vmatpush1.msra.mxu0 0.0
    %123 = vmatprep.subr.mxu0 0.0
    %124 = vmatpush1.msra.mxu0 0.0
    %125 = vmatprep.subr.mxu0 0.0
    %126 = vmatpush1.msra.mxu0 0.0
    %127 = vmatprep.subr.mxu0 0.0
    %128 = vmatpush1.msra.mxu0 0.0
    %129 = vmatprep.subr.mxu0 0.0
    %130 = vmatpush1.msra.mxu0 0.0
    %131 = vmatprep.subr.mxu0 0.0
    %132 = vmatpush1.msra.mxu0 0.0
    %133 = vmatprep.subr.mxu0 0.0
    %134 = vmatpush1.msra.mxu0 0.0
    %135 = vmatprep.subr.mxu0 0.0
    %136 = vmatpush1.msra.mxu0 0.0
    %137 = vmatprep.subr.mxu0 0.0
    %138 = vmatpush1.msra.mxu0 0.0
    %139 = vmatprep.subr.mxu0 0.0
    %140 = vmatpush1.msra.mxu0 0.0
    %141 = vmatprep.subr.mxu0 0.0
    %142 = vmatpush1.msra.mxu0 0.0
    %143 = vmatprep.subr.mxu0 0.0
    %144 = vmatpush1.msra.mxu0 0.0
    %145 = vmatprep.subr.mxu0 0.0
    %146 = vmatpush1.msra.mxu0 0.0
    %147 = vmatprep.subr.mxu0 0.0
    %148 = vmatpush1.msra.mxu0 0.0
    %149 = vmatprep.subr.mxu0 0.0
    %150 = vmatpush1.msra.mxu0 0.0
    %151 = vmatprep.subr.mxu0 0.0
    %152 = vmatpush1.msra.mxu0 0.0
    %153 = vmatprep.subr.mxu0 0.0
    %154 = vmatpush1.msra.mxu0 0.0
    %155 = vmatprep.subr.mxu0 0.0
    %156 = vmatpush1.msra.mxu0 0.0
    %157 = vmatprep.subr.mxu0 0.0
    %158 = vmatpush1.msra.mxu0 0.0
    %159 = vmatprep.subr.mxu0 0.0
    %160 = vmatpush1.msra.mxu0 0.0
    %161 = vmatprep.subr.mxu0 0.0
    %162 = vmatpush1.msra.mxu0 0.0
    %163 = vmatprep.subr.mxu0 0.0
    %164 = vmatpush1.msra.mxu0 0.0
    %165 = vmatprep.subr.mxu0 0.0
    %166 = vmatpush1.msra.mxu0 0.0
    %167 = vmatprep.subr.mxu0 0.0
    %168 = vmatpush1.msra.mxu0 0.0
    %169 = vmatprep.subr.mxu0 0.0
    %170 = vmatpush1.msra.mxu0 0.0
    %171 = vmatprep.subr.mxu0 0.0
    %172 = vmatpush1.msra.mxu0 0.0
    %173 = vmatprep.mubr.f32.mxu0 0.0
    %174 = vmatmul.mubr.f32.gmra.mrb[0].mxu0 %v101
    %v175 = vpop.f32.mrb[0].mxu0
    %v176 = vadd.f32 0.0, %v175
    %v177 = vpop.f32.mrb[0].mxu0
    %178 = vmatprep.mubr.f32.mxu0 0.0
    %179 = vmatmul.mubr.f32.gmra.mrb[0].mxu0 %v104
    %v180 = vpop.f32.mrb[0].mxu0
    %v181 = vadd.f32 0.0, %v180
    %v182 = vpop.f32.mrb[0].mxu0
    %183 = vmatprep.mubr.f32.mxu0 0.0
    %184 = vmatmul.mubr.f32.gmra.mrb[0].mxu0 %v107
    %v185 = vpop.f32.mrb[0].mxu0
    %v186 = vadd.f32 0.0, %v185
    %v187 = vpop.f32.mrb[0].mxu0
    %188 = vdwg.mxu0
    %v189 = vmax.f32 %v176, 0.0
    %v190 = vmax.f32 %v181, 0.0
    %v191 = vmax.f32 %v186, 0.0
    %vm192 = vcmask 171008
    %v194 = vsel %vm192, %v60, 0
    %v197 = vsel %vm192, %v61, 0
    %v200 = vsel %vm192, %v62, 0
    %vm202 = vcmask 1044480
    %v204 = vsel %vm202, %v191, 0
    %206 = vmatprep.subr.mxu0 0.0
    %207 = vmatpush1.msra.mxu0 %v189
    %208 = vmatprep.subr.mxu0 0.0
    %209 = vmatpush1.msra.mxu0 %v190
    %210 = vmatprep.subr.mxu0 0.0
    %211 = vmatpush1.msra.mxu0 %v204
    %212 = vmatprep.subr.mxu0 0.0
    %213 = vmatpush1.msra.mxu0 0.0
    %214 = vmatprep.subr.mxu0 0.0
    %215 = vmatpush1.msra.mxu0 0.0
    %216 = vmatprep.subr.mxu0 0.0
    %217 = vmatpush1.msra.mxu0 0.0
    %218 = vmatprep.subr.mxu0 0.0
    %219 = vmatpush1.msra.mxu0 0.0
    %220 = vmatprep.subr.mxu0 0.0
    %221 = vmatpush1.msra.mxu0 0.0
    %222 = vmatprep.subr.mxu0 0.0
    %223 = vmatpush1.msra.mxu0 0.0
    %224 = vmatprep.subr.mxu0 0.0
    %225 = vmatpush1.msra.mxu0 0.0
    %226 = vmatprep.subr.mxu0 0.0
    %227 = vmatpush1.msra.mxu0 0.0
    %228 = vmatprep.subr.mxu0 0.0
    %229 = vmatpush1.msra.mxu0 0.0
    %230 = vmatprep.subr.mxu0 0.0
    %231 = vmatpush1.msra.mxu0 0.0
    %232 = vmatprep.subr.mxu0 0.0
    %233 = vmatpush1.msra.mxu0 0.0
    %234 = vmatprep.subr.mxu0 0.0
    %235 = vmatpush1.msra.mxu0 0.0
    %236 = vmatprep.subr.mxu0 0.0
    %237 = vmatpush1.msra.mxu0 0.0
    %238 = vmatprep.subr.mxu0 0.0
    %239 = vmatpush1.msra.mxu0 0.0
    %240 = vmatprep.subr.mxu0 0.0
    %241 = vmatpush1.msra.mxu0 0.0
    %242 = vmatprep.subr.mxu0 0.0
    %243 = vmatpush1.msra.mxu0 0.0
    %244 = vmatprep.subr.mxu0 0.0
    %245 = vmatpush1.msra.mxu0 0.0
    %246 = vmatprep.subr.mxu0 0.0
    %247 = vmatpush1.msra.mxu0 0.0
    %248 = vmatprep.subr.mxu0 0.0
    %249 = vmatpush1.msra.mxu0 0.0
    %250 = vmatprep.subr.mxu0 0.0
    %251 = vmatpush1.msra.mxu0 0.0
    %252 = vmatprep.subr.mxu0 0.0
    %253 = vmatpush1.msra.mxu0 0.0
    %254 = vmatprep.subr.mxu0 0.0
    %255 = vmatpush1.msra.mxu0 0.0
    %256 = vmatprep.subr.mxu0 0.0
    %257 = vmatpush1.msra.mxu0 0.0
    %258 = vmatprep.subr.mxu0 0.0
    %259 = vmatpush1.msra.mxu0 0.0
    %260 = vmatprep.subr.mxu0 0.0
    %261 = vmatpush1.msra.mxu0 0.0
    %262 = vmatprep.subr.mxu0 0.0
    %263 = vmatpush1.msra.mxu0 0.0
    %264 = vmatprep.subr.mxu0 0.0
    %265 = vmatpush1.msra.mxu0 0.0
    %266 = vmatprep.subr.mxu0 0.0
    %267 = vmatpush1.msra.mxu0 0.0
    %268 = vmatprep.subr.mxu0 0.0
    %269 = vmatpush1.msra.mxu0 0.0
    %270 = vmatprep.mubr.f32.mxu0 0.0
    %271 = vmatmul.mubr.f32.gmra.mrb[0].mxu0 %v194
    %v272 = vpop.f32.mrb[0].mxu0
    %v273 = vadd.f32 0.0, %v272
    %v274 = vpop.f32.mrb[0].mxu0
    %275 = vmatprep.mubr.f32.mxu0 0.0
    %276 = vmatmul.mubr.f32.gmra.mrb[0].mxu0 %v197
    %v277 = vpop.f32.mrb[0].mxu0
    %v278 = vadd.f32 0.0, %v277
    %v279 = vpop.f32.mrb[0].mxu0
    %280 = vmatprep.mubr.f32.mxu0 0.0
    %281 = vmatmul.mubr.f32.gmra.mrb[0].mxu0 %v200
    %v282 = vpop.f32.mrb[0].mxu0
    %v283 = vadd.f32 0.0, %v282
    %v284 = vpop.f32.mrb[0].mxu0
    %285 = vdwg.mxu0
    %v287 = vsel %vm99, %v273, 0
    %v290 = vsel %vm99, %v278, 0
    %v293 = vsel %vm99, %v283, 0
    %295 = vmatprep.subr.mxu0 0.0
    %296 = vmatpush1.msra.mxu0 %v70
    %297 = vmatprep.subr.mxu0 0.0
    %298 = vmatpush1.msra.mxu0 %v71
    %299 = vmatprep.subr.mxu0 0.0
    %300 = vmatpush1.msra.mxu0 %v72
    %301 = vmatprep.subr.mxu0 0.0
    %302 = vmatpush1.msra.mxu0 %v73
    %303 = vmatprep.subr.mxu0 0.0
    %304 = vmatpush1.msra.mxu0 0.0
    %305 = vmatprep.subr.mxu0 0.0
    %306 = vmatpush1.msra.mxu0 0.0
    %307 = vmatprep.subr.mxu0 0.0
    %308 = vmatpush1.msra.mxu0 0.0
    %309 = vmatprep.subr.mxu0 0.0
    %310 = vmatpush1.msra.mxu0 0.0
    %311 = vmatprep.subr.mxu0 0.0
    %312 = vmatpush1.msra.mxu0 0.0
    %313 = vmatprep.subr.mxu0 0.0
    %314 = vmatpush1.msra.mxu0 0.0
    %315 = vmatprep.subr.mxu0 0.0
    %316 = vmatpush1.msra.mxu0 0.0
    %317 = vmatprep.subr.mxu0 0.0
    %318 = vmatpush1.msra.mxu0 0.0
    %319 = vmatprep.subr.mxu0 0.0
    %320 = vmatpush1.msra.mxu0 0.0
    %321 = vmatprep.subr.mxu0 0.0
    %322 = vmatpush1.msra.mxu0 0.0
    %323 = vmatprep.subr.mxu0 0.0
    %324 = vmatpush1.msra.mxu0 0.0
    %325 = vmatprep.subr.mxu0 0.0
    %326 = vmatpush1.msra.mxu0 0.0
    %327 = vmatprep.subr.mxu0 0.0
    %328 = vmatpush1.msra.mxu0 0.0
    %329 = vmatprep.subr.mxu0 0.0
    %330 = vmatpush1.msra.mxu0 0.0
    %331 = vmatprep.subr.mxu0 0.0
    %332 = vmatpush1.msra.mxu0 0.0
    %333 = vmatprep.subr.mxu0 0.0
    %334 = vmatpush1.msra.mxu0 0.0
    %335 = vmatprep.subr.mxu0 0.0
    %336 = vmatpush1.msra.mxu0 0.0
    %337 = vmatprep.subr.mxu0 0.0
    %338 = vmatpush1.msra.mxu0 0.0
    %339 = vmatprep.subr.mxu0 0.0
    %340 = vmatpush1.msra.mxu0 0.0
    %341 = vmatprep.subr.mxu0 0.0
    %342 = vmatpush1.msra.mxu0 0.0
    %343 = vmatprep.subr.mxu0 0.0
    %344 = vmatpush1.msra.mxu0 0.0
    %345 = vmatprep.subr.mxu0 0.0
    %346 = vmatpush1.msra.mxu0 0.0
    %347 = vmatprep.subr.mxu0 0.0
    %348 = vmatpush1.msra.mxu0 0.0
    %349 = vmatprep.subr.mxu0 0.0
    %350 = vmatpush1.msra.mxu0 0.0
    %351 = vmatprep.subr.mxu0 0.0
    %352 = vmatpush1.msra.mxu0 0.0
    %353 = vmatprep.subr.mxu0 0.0
    %354 = vmatpush1.msra.mxu0 0.0
    %355 = vmatprep.subr.mxu0 0.0
    %356 = vmatpush1.msra.mxu0 0.0
    %357 = vmatprep.subr.mxu0 0.0
    %358 = vmatpush1.msra.mxu0 0.0
    %359 = vmatprep.mubr.f32.mxu0 0.0
    %360 = vmatmul.mubr.f32.gmra.mrb[0].mxu0 %v287
    %v361 = vpop.f32.mrb[0].mxu0
    %v362 = vadd.f32 0.0, %v361
    %v363 = vpop.f32.mrb[0].mxu0
    %364 = vmatprep.mubr.f32.mxu0 0.0
    %365 = vmatmul.mubr.f32.gmra.mrb[0].mxu0 %v290
    %v366 = vpop.f32.mrb[0].mxu0
    %v367 = vadd.f32 0.0, %v366
    %v368 = vpop.f32.mrb[0].mxu0
    %369 = vmatprep.mubr.f32.mxu0 0.0
    %370 = vmatmul.mubr.f32.gmra.mrb[0].mxu0 %v293
    %v371 = vpop.f32.mrb[0].mxu0
    %v372 = vadd.f32 0.0, %v371
    %v373 = vpop.f32.mrb[0].mxu0
    %374 = vdwg.mxu0
    %v375 = vadd.f32 %v176, %v362
    %v376 = vadd.f32 %v181, %v367
    %v377 = vadd.f32 %v186, %v372
    %v378 = vmax.f32 %v375, 0.0
    %v379 = vmax.f32 %v376, 0.0
    %v380 = vmax.f32 %v377, 0.0
    %v382 = vsel %vm202, %v380, 0
    %384 = vmatprep.subr.mxu0 0.0
    %385 = vmatpush1.msra.mxu0 %v378
    %386 = vmatprep.subr.mxu0 0.0
    %387 = vmatpush1.msra.mxu0 %v379
    %388 = vmatprep.subr.mxu0 0.0
    %389 = vmatpush1.msra.mxu0 %v382
    %390 = vmatprep.subr.mxu0 0.0
    %391 = vmatpush1.msra.mxu0 0.0
    %392 = vmatprep.subr.mxu0 0.0
    %393 = vmatpush1.msra.mxu0 0.0
    %394 = vmatprep.subr.mxu0 0.0
    %395 = vmatpush1.msra.mxu0 0.0
    %396 = vmatprep.subr.mxu0 0.0
    %397 = vmatpush1.msra.mxu0 0.0
    %398 = vmatprep.subr.mxu0 0.0
    %399 = vmatpush1.msra.mxu0 0.0
    %400 = vmatprep.subr.mxu0 0.0
    %401 = vmatpush1.msra.mxu0 0.0
    %402 = vmatprep.subr.mxu0 0.0
    %403 = vmatpush1.msra.mxu0 0.0
    %404 = vmatprep.subr.mxu0 0.0
    %405 = vmatpush1.msra.mxu0 0.0
    %406 = vmatprep.subr.mxu0 0.0
    %407 = vmatpush1.msra.mxu0 0.0
    %408 = vmatprep.subr.mxu0 0.0
    %409 = vmatpush1.msra.mxu0 0.0
    %410 = vmatprep.subr.mxu0 0.0
    %411 = vmatpush1.msra.mxu0 0.0
    %412 = vmatprep.subr.mxu0 0.0
    %413 = vmatpush1.msra.mxu0 0.0
    %414 = vmatprep.subr.mxu0 0.0
    %415 = vmatpush1.msra.mxu0 0.0
    %416 = vmatprep.subr.mxu0 0.0
    %417 = vmatpush1.msra.mxu0 0.0
    %418 = vmatprep.subr.mxu0 0.0
    %419 = vmatpush1.msra.mxu0 0.0
    %420 = vmatprep.subr.mxu0 0.0
    %421 = vmatpush1.msra.mxu0 0.0
    %422 = vmatprep.subr.mxu0 0.0
    %423 = vmatpush1.msra.mxu0 0.0
    %424 = vmatprep.subr.mxu0 0.0
    %425 = vmatpush1.msra.mxu0 0.0
    %426 = vmatprep.subr.mxu0 0.0
    %427 = vmatpush1.msra.mxu0 0.0
    %428 = vmatprep.subr.mxu0 0.0
    %429 = vmatpush1.msra.mxu0 0.0
    %430 = vmatprep.subr.mxu0 0.0
    %431 = vmatpush1.msra.mxu0 0.0
    %432 = vmatprep.subr.mxu0 0.0
    %433 = vmatpush1.msra.mxu0 0.0
    %434 = vmatprep.subr.mxu0 0.0
    %435 = vmatpush1.msra.mxu0 0.0
    %436 = vmatprep.subr.mxu0 0.0
    %437 = vmatpush1.msra.mxu0 0.0
    %438 = vmatprep.subr.mxu0 0.0
    %439 = vmatpush1.msra.mxu0 0.0
    %440 = vmatprep.subr.mxu0 0.0
    %441 = vmatpush1.msra.mxu0 0.0
    %442 = vmatprep.subr.mxu0 0.0
    %443 = vmatpush1.msra.mxu0 0.0
    %444 = vmatprep.subr.mxu0 0.0
    %445 = vmatpush1.msra.mxu0 0.0
    %446 = vmatprep.subr.mxu0 0.0
    %447 = vmatpush1.msra.mxu0 0.0
    %448 = vmatprep.mubr.f32.mxu0 0.0
    %449 = vmatmul.mubr.f32.gmra.mrb[0].mxu0 %v194
    %v450 = vpop.f32.mrb[0].mxu0
    %v451 = vadd.f32 0.0, %v450
    %v452 = vpop.f32.mrb[0].mxu0
    %453 = vmatprep.mubr.f32.mxu0 0.0
    %454 = vmatmul.mubr.f32.gmra.mrb[0].mxu0 %v197
    %v455 = vpop.f32.mrb[0].mxu0
    %v456 = vadd.f32 0.0, %v455
    %v457 = vpop.f32.mrb[0].mxu0
    %458 = vmatprep.mubr.f32.mxu0 0.0
    %459 = vmatmul.mubr.f32.gmra.mrb[0].mxu0 %v200
    %v460 = vpop.f32.mrb[0].mxu0
    %v461 = vadd.f32 0.0, %v460
    %v462 = vpop.f32.mrb[0].mxu0
    %463 = vdwg.mxu0
    %v465 = vsel %vm99, %v451, 0
    %v468 = vsel %vm99, %v456, 0
    %v471 = vsel %vm99, %v461, 0
    %473 = vmatprep.subr.mxu0 0.0
    %474 = vmatpush1.msra.mxu0 %v70
    %475 = vmatprep.subr.mxu0 0.0
    %476 = vmatpush1.msra.mxu0 %v71
    %477 = vmatprep.subr.mxu0 0.0
    %478 = vmatpush1.msra.mxu0 %v72
    %479 = vmatprep.subr.mxu0 0.0
    %480 = vmatpush1.msra.mxu0 %v73
    %481 = vmatprep.subr.mxu0 0.0
    %482 = vmatpush1.msra.mxu0 0.0
    %483 = vmatprep.subr.mxu0 0.0
    %484 = vmatpush1.msra.mxu0 0.0
    %485 = vmatprep.subr.mxu0 0.0
    %486 = vmatpush1.msra.mxu0 0.0
    %487 = vmatprep.subr.mxu0 0.0
    %488 = vmatpush1.msra.mxu0 0.0
    %489 = vmatprep.subr.mxu0 0.0
    %490 = vmatpush1.msra.mxu0 0.0
    %491 = vmatprep.subr.mxu0 0.0
    %492 = vmatpush1.msra.mxu0 0.0
    %493 = vmatprep.subr.mxu0 0.0
    %494 = vmatpush1.msra.mxu0 0.0
    %495 = vmatprep.subr.mxu0 0.0
    %496 = vmatpush1.msra.mxu0 0.0
    %497 = vmatprep.subr.mxu0 0.0
    %498 = vmatpush1.msra.mxu0 0.0
    %499 = vmatprep.subr.mxu0 0.0
    %500 = vmatpush1.msra.mxu0 0.0
    %501 = vmatprep.subr.mxu0 0.0
    %502 = vmatpush1.msra.mxu0 0.0
    %503 = vmatprep.subr.mxu0 0.0
    %504 = vmatpush1.msra.mxu0 0.0
    %505 = vmatprep.subr.mxu0 0.0
    %506 = vmatpush1.msra.mxu0 0.0
    %507 = vmatprep.subr.mxu0 0.0
    %508 = vmatpush1.msra.mxu0 0.0
    %509 = vmatprep.subr.mxu0 0.0
    %510 = vmatpush1.msra.mxu0 0.0
    %511 = vmatprep.subr.mxu0 0.0
    %512 = vmatpush1.msra.mxu0 0.0
    %513 = vmatprep.subr.mxu0 0.0
    %514 = vmatpush1.msra.mxu0 0.0
    %515 = vmatprep.subr.mxu0 0.0
    %516 = vmatpush1.msra.mxu0 0.0
    %517 = vmatprep.subr.mxu0 0.0
    %518 = vmatpush1.msra.mxu0 0.0
    %519 = vmatprep.subr.mxu0 0.0
    %520 = vmatpush1.msra.mxu0 0.0
    %521 = vmatprep.subr.mxu0 0.0
    %522 = vmatpush1.msra.mxu0 0.0
    %523 = vmatprep.subr.mxu0 0.0
    %524 = vmatpush1.msra.mxu0 0.0
    %525 = vmatprep.subr.mxu0 0.0
    %526 = vmatpush1.msra.mxu0 0.0
    %527 = vmatprep.subr.mxu0 0.0
    %528 = vmatpush1.msra.mxu0 0.0
    %529 = vmatprep.subr.mxu0 0.0
    %530 = vmatpush1.msra.mxu0 0.0
    %531 = vmatprep.subr.mxu0 0.0
    %532 = vmatpush1.msra.mxu0 0.0
    %533 = vmatprep.subr.mxu0 0.0
    %534 = vmatpush1.msra.mxu0 0.0
    %535 = vmatprep.subr.mxu0 0.0
    %536 = vmatpush1.msra.mxu0 0.0
    %537 = vmatprep.mubr.f32.mxu0 0.0
    %538 = vmatmul.mubr.f32.gmra.mrb[0].mxu0 %v465
    %v539 = vpop.f32.mrb[0].mxu0
    %v540 = vadd.f32 0.0, %v539
    %v541 = vpop.f32.mrb[0].mxu0
    %542 = vmatprep.mubr.f32.mxu0 0.0
    %543 = vmatmul.mubr.f32.gmra.mrb[0].mxu0 %v468
    %v544 = vpop.f32.mrb[0].mxu0
    %v545 = vadd.f32 0.0, %v544
    %v546 = vpop.f32.mrb[0].mxu0
    %547 = vmatprep.mubr.f32.mxu0 0.0
    %548 = vmatmul.mubr.f32.gmra.mrb[0].mxu0 %v471
    %v549 = vpop.f32.mrb[0].mxu0
    %v550 = vadd.f32 0.0, %v549
    %v551 = vpop.f32.mrb[0].mxu0
    %552 = vdwg.mxu0
    %v553 = vadd.f32 %v176, %v540
    %v554 = vadd.f32 %v181, %v545
    %v555 = vadd.f32 %v186, %v550
    %v556 = vmax.f32 %v553, 0.0
    %v557 = vmax.f32 %v554, 0.0
    %v558 = vmax.f32 %v555, 0.0
    %v560 = vsel %vm192, %v63, 0
    %v563 = vsel %vm192, %v64, 0
    %v566 = vsel %vm202, %v558, 0
    %568 = vmatprep.subr.mxu0 0.0
    %569 = vmatpush1.msra.mxu0 %v556
    %570 = vmatprep.subr.mxu0 0.0
    %571 = vmatpush1.msra.mxu0 %v557
    %572 = vmatprep.subr.mxu0 0.0
    %573 = vmatpush1.msra.mxu0 %v566
    %574 = vmatprep.subr.mxu0 0.0
    %575 = vmatpush1.msra.mxu0 0.0
    %576 = vmatprep.subr.mxu0 0.0
    %577 = vmatpush1.msra.mxu0 0.0
    %578 = vmatprep.subr.mxu0 0.0
    %579 = vmatpush1.msra.mxu0 0.0
    %580 = vmatprep.subr.mxu0 0.0
    %581 = vmatpush1.msra.mxu0 0.0
    %582 = vmatprep.subr.mxu0 0.0
    %583 = vmatpush1.msra.mxu0 0.0
    %584 = vmatprep.subr.mxu0 0.0
    %585 = vmatpush1.msra.mxu0 0.0
    %586 = vmatprep.subr.mxu0 0.0
    %587 = vmatpush1.msra.mxu0 0.0
    %588 = vmatprep.subr.mxu0 0.0
    %589 = vmatpush1.msra.mxu0 0.0
    %590 = vmatprep.subr.mxu0 0.0
    %591 = vmatpush1.msra.mxu0 0.0
    %592 = vmatprep.subr.mxu0 0.0
    %593 = vmatpush1.msra.mxu0 0.0
    %594 = vmatprep.subr.mxu0 0.0
    %595 = vmatpush1.msra.mxu0 0.0
    %596 = vmatprep.subr.mxu0 0.0
    %597 = vmatpush1.msra.mxu0 0.0
    %598 = vmatprep.subr.mxu0 0.0
    %599 = vmatpush1.msra.mxu0 0.0
    %600 = vmatprep.subr.mxu0 0.0
    %601 = vmatpush1.msra.mxu0 0.0
    %602 = vmatprep.subr.mxu0 0.0
    %603 = vmatpush1.msra.mxu0 0.0
    %604 = vmatprep.subr.mxu0 0.0
    %605 = vmatpush1.msra.mxu0 0.0
    %606 = vmatprep.subr.mxu0 0.0
    %607 = vmatpush1.msra.mxu0 0.0
    %608 = vmatprep.subr.mxu0 0.0
    %609 = vmatpush1.msra.mxu0 0.0
    %610 = vmatprep.subr.mxu0 0.0
    %611 = vmatpush1.msra.mxu0 0.0
    %612 = vmatprep.subr.mxu0 0.0
    %613 = vmatpush1.msra.mxu0 0.0
    %614 = vmatprep.subr.mxu0 0.0
    %615 = vmatpush1.msra.mxu0 0.0
    %616 = vmatprep.subr.mxu0 0.0
    %617 = vmatpush1.msra.mxu0 0.0
    %618 = vmatprep.subr.mxu0 0.0
    %619 = vmatpush1.msra.mxu0 0.0
    %620 = vmatprep.subr.mxu0 0.0
    %621 = vmatpush1.msra.mxu0 0.0
    %622 = vmatprep.subr.mxu0 0.0
    %623 = vmatpush1.msra.mxu0 0.0
    %624 = vmatprep.subr.mxu0 0.0
    %625 = vmatpush1.msra.mxu0 0.0
    %626 = vmatprep.subr.mxu0 0.0
    %627 = vmatpush1.msra.mxu0 0.0
    %628 = vmatprep.subr.mxu0 0.0
    %629 = vmatpush1.msra.mxu0 0.0
    %630 = vmatprep.subr.mxu0 0.0
    %631 = vmatpush1.msra.mxu0 0.0
    %632 = vmatprep.mubr.f32.mxu0 0.0
    %633 = vmatmul.mubr.f32.gmra.mrb[0].mxu0 %v560
    %v634 = vpop.f32.mrb[0].mxu0
    %v635 = vadd.f32 0.0, %v634
    %v636 = vpop.f32.mrb[0].mxu0
    %637 = vmatprep.mubr.f32.mxu0 0.0
    %638 = vmatmul.mubr.f32.gmra.mrb[0].mxu0 %v563
    %v639 = vpop.f32.mrb[0].mxu0
    %v640 = vadd.f32 0.0, %v639
    %v641 = vpop.f32.mrb[0].mxu0
    %642 = vdwg.mxu0
    %v644 = vsel %vm99, %v635, 0
    %v647 = vsel %vm99, %v640, 0
    %649 = vmatprep.subr.mxu0 0.0
    %650 = vmatpush1.msra.mxu0 %v77
    %651 = vmatprep.subr.mxu0 0.0
    %652 = vmatpush1.msra.mxu0 %v78
    %653 = vmatprep.subr.mxu0 0.0
    %654 = vmatpush1.msra.mxu0 %v79
    %655 = vmatprep.subr.mxu0 0.0
    %656 = vmatpush1.msra.mxu0 %v80
    %657 = vmatprep.subr.mxu0 0.0
    %658 = vmatpush1.msra.mxu0 0.0
    %659 = vmatprep.subr.mxu0 0.0
    %660 = vmatpush1.msra.mxu0 0.0
    %661 = vmatprep.subr.mxu0 0.0
    %662 = vmatpush1.msra.mxu0 0.0
    %663 = vmatprep.subr.mxu0 0.0
    %664 = vmatpush1.msra.mxu0 0.0
    %665 = vmatprep.subr.mxu0 0.0
    %666 = vmatpush1.msra.mxu0 0.0
    %667 = vmatprep.subr.mxu0 0.0
    %668 = vmatpush1.msra.mxu0 0.0
    %669 = vmatprep.subr.mxu0 0.0
    %670 = vmatpush1.msra.mxu0 0.0
    %671 = vmatprep.subr.mxu0 0.0
    %672 = vmatpush1.msra.mxu0 0.0
    %673 = vmatprep.subr.mxu0 0.0
    %674 = vmatpush1.msra.mxu0 0.0
    %675 = vmatprep.subr.mxu0 0.0
    %676 = vmatpush1.msra.mxu0 0.0
    %677 = vmatprep.subr.mxu0 0.0
    %678 = vmatpush1.msra.mxu0 0.0
    %679 = vmatprep.subr.mxu0 0.0
    %680 = vmatpush1.msra.mxu0 0.0
    %681 = vmatprep.subr.mxu0 0.0
    %682 = vmatpush1.msra.mxu0 0.0
    %683 = vmatprep.subr.mxu0 0.0
    %684 = vmatpush1.msra.mxu0 0.0
    %685 = vmatprep.subr.mxu0 0.0
    %686 = vmatpush1.msra.mxu0 0.0
    %687 = vmatprep.subr.mxu0 0.0
    %688 = vmatpush1.msra.mxu0 0.0
    %689 = vmatprep.subr.mxu0 0.0
    %690 = vmatpush1.msra.mxu0 0.0
    %691 = vmatprep.subr.mxu0 0.0
    %692 = vmatpush1.msra.mxu0 0.0
    %693 = vmatprep.subr.mxu0 0.0
    %694 = vmatpush1.msra.mxu0 0.0
    %695 = vmatprep.subr.mxu0 0.0
    %696 = vmatpush1.msra.mxu0 0.0
    %697 = vmatprep.subr.mxu0 0.0
    %698 = vmatpush1.msra.mxu0 0.0
    %699 = vmatprep.subr.mxu0 0.0
    %700 = vmatpush1.msra.mxu0 0.0
    %701 = vmatprep.subr.mxu0 0.0
    %702 = vmatpush1.msra.mxu0 0.0
    %703 = vmatprep.subr.mxu0 0.0
    %704 = vmatpush1.msra.mxu0 0.0
    %705 = vmatprep.subr.mxu0 0.0
    %706 = vmatpush1.msra.mxu0 0.0
    %707 = vmatprep.subr.mxu0 0.0
    %708 = vmatpush1.msra.mxu0 0.0
    %709 = vmatprep.subr.mxu0 0.0
    %710 = vmatpush1.msra.mxu0 0.0
    %711 = vmatprep.subr.mxu0 0.0
    %712 = vmatpush1.msra.mxu0 0.0
    %713 = vmatprep.mubr.f32.mxu0 0.0
    %714 = vmatmul.mubr.f32.gmra.mrb[0].mxu0 %v644
    %v715 = vpop.f32.mrb[0].mxu0
    %v716 = vadd.f32 0.0, %v715
    %v717 = vpop.f32.mrb[0].mxu0
    %718 = vmatprep.mubr.f32.mxu0 0.0
    %719 = vmatmul.mubr.f32.gmra.mrb[0].mxu0 %v647
    %v720 = vpop.f32.mrb[0].mxu0
    %v721 = vadd.f32 0.0, %v720
    %v722 = vpop.f32.mrb[0].mxu0
    %723 = vdwg.mxu0
    %vm724 = vcmask 195584
    %v726 = vsel %vm724, %v57, 0
    %v729 = vsel %vm724, %v58, 0
    %731 = vmatprep.subr.mxu0 0.0
    %732 = vmatpush1.msra.mxu0 %v74
    %733 = vmatprep.subr.mxu0 0.0
    %734 = vmatpush1.msra.mxu0 %v75
    %735 = vmatprep.subr.mxu0 0.0
    %736 = vmatpush1.msra.mxu0 %v76
    %737 = vmatprep.subr.mxu0 0.0
    %738 = vmatpush1.msra.mxu0 0.0
    %739 = vmatprep.subr.mxu0 0.0
    %740 = vmatpush1.msra.mxu0 0.0
    %741 = vmatprep.subr.mxu0 0.0
    %742 = vmatpush1.msra.mxu0 0.0
    %743 = vmatprep.subr.mxu0 0.0
    %744 = vmatpush1.msra.mxu0 0.0
    %745 = vmatprep.subr.mxu0 0.0
    %746 = vmatpush1.msra.mxu0 0.0
    %747 = vmatprep.subr.mxu0 0.0
    %748 = vmatpush1.msra.mxu0 0.0
    %749 = vmatprep.subr.mxu0 0.0
    %750 = vmatpush1.msra.mxu0 0.0
    %751 = vmatprep.subr.mxu0 0.0
    %752 = vmatpush1.msra.mxu0 0.0
    %753 = vmatprep.subr.mxu0 0.0
    %754 = vmatpush1.msra.mxu0 0.0
    %755 = vmatprep.subr.mxu0 0.0
    %756 = vmatpush1.msra.mxu0 0.0
    %757 = vmatprep.subr.mxu0 0.0
    %758 = vmatpush1.msra.mxu0 0.0
    %759 = vmatprep.subr.mxu0 0.0
    %760 = vmatpush1.msra.mxu0 0.0
    %761 = vmatprep.subr.mxu0 0.0
    %762 = vmatpush1.msra.mxu0 0.0
    %763 = vmatprep.subr.mxu0 0.0
    %764 = vmatpush1.msra.mxu0 0.0
    %765 = vmatprep.subr.mxu0 0.0
    %766 = vmatpush1.msra.mxu0 0.0
    %767 = vmatprep.subr.mxu0 0.0
    %768 = vmatpush1.msra.mxu0 0.0
    %769 = vmatprep.subr.mxu0 0.0
    %770 = vmatpush1.msra.mxu0 0.0
    %771 = vmatprep.subr.mxu0 0.0
    %772 = vmatpush1.msra.mxu0 0.0
    %773 = vmatprep.subr.mxu0 0.0
    %774 = vmatpush1.msra.mxu0 0.0
    %775 = vmatprep.subr.mxu0 0.0
    %776 = vmatpush1.msra.mxu0 0.0
    %777 = vmatprep.subr.mxu0 0.0
    %778 = vmatpush1.msra.mxu0 0.0
    %779 = vmatprep.subr.mxu0 0.0
    %780 = vmatpush1.msra.mxu0 0.0
    %781 = vmatprep.subr.mxu0 0.0
    %782 = vmatpush1.msra.mxu0 0.0
    %783 = vmatprep.subr.mxu0 0.0
    %784 = vmatpush1.msra.mxu0 0.0
    %785 = vmatprep.subr.mxu0 0.0
    %786 = vmatpush1.msra.mxu0 0.0
    %787 = vmatprep.subr.mxu0 0.0
    %788 = vmatpush1.msra.mxu0 0.0
    %789 = vmatprep.subr.mxu0 0.0
    %790 = vmatpush1.msra.mxu0 0.0
    %791 = vmatprep.subr.mxu0 0.0
    %792 = vmatpush1.msra.mxu0 0.0
    %793 = vmatprep.subr.mxu0 0.0
    %794 = vmatpush1.msra.mxu0 0.0
    %795 = vmatprep.mubr.f32.mxu0 0.0
    %796 = vmatmul.mubr.f32.gmra.mrb[0].mxu0 %v726
    %v797 = vpop.f32.mrb[0].mxu0
    %v798 = vadd.f32 %v716, %v797
    %v799 = vpop.f32.mrb[0].mxu0
    %800 = vmatprep.mubr.f32.mxu0 0.0
    %801 = vmatmul.mubr.f32.gmra.mrb[0].mxu0 %v729
    %v802 = vpop.f32.mrb[0].mxu0
    %v803 = vadd.f32 %v721, %v802
    %v804 = vpop.f32.mrb[0].mxu0
    %805 = vdwg.mxu0
    %v806 = vlaneseq
    %v807 = vshrl.u32 %v806, 7
    %v808 = vsub.s32 0, %v807
    %v809 = vrot.slane %v95, %v808
    %v810 = vadd.f32 %v798, %v809
    %v811 = vadd.f32 %v803, %v809
    %v812 = vmax.f32 %v810, 0.0
    %v813 = vmax.f32 %v811, 0.0
    %vm814 = vcmask 80896
    %v816 = vsel %vm814, %v65, 0
    %vm818 = vcmask 1041408
    %v820 = vsel %vm818, %v813, 0
    %822 = vmatprep.subr.mxu0 0.0
    %823 = vmatpush1.msra.mxu0 %v812
    %824 = vmatprep.subr.mxu0 0.0
    %825 = vmatpush1.msra.mxu0 %v820
    %826 = vmatprep.subr.mxu0 0.0
    %827 = vmatpush1.msra.mxu0 0.0
    %828 = vmatprep.subr.mxu0 0.0
    %829 = vmatpush1.msra.mxu0 0.0
    %830 = vmatprep.subr.mxu0 0.0
    %831 = vmatpush1.msra.mxu0 0.0
    %832 = vmatprep.subr.mxu0 0.0
    %833 = vmatpush1.msra.mxu0 0.0
    %834 = vmatprep.subr.mxu0 0.0
    %835 = vmatpush1.msra.mxu0 0.0
    %836 = vmatprep.subr.mxu0 0.0
    %837 = vmatpush1.msra.mxu0 0.0
    %838 = vmatprep.subr.mxu0 0.0
    %839 = vmatpush1.msra.mxu0 0.0
    %840 = vmatprep.subr.mxu0 0.0
    %841 = vmatpush1.msra.mxu0 0.0
    %842 = vmatprep.subr.mxu0 0.0
    %843 = vmatpush1.msra.mxu0 0.0
    %844 = vmatprep.subr.mxu0 0.0
    %845 = vmatpush1.msra.mxu0 0.0
    %846 = vmatprep.subr.mxu0 0.0
    %847 = vmatpush1.msra.mxu0 0.0
    %848 = vmatprep.subr.mxu0 0.0
    %849 = vmatpush1.msra.mxu0 0.0
    %850 = vmatprep.subr.mxu0 0.0
    %851 = vmatpush1.msra.mxu0 0.0
    %852 = vmatprep.subr.mxu0 0.0
    %853 = vmatpush1.msra.mxu0 0.0
    %854 = vmatprep.subr.mxu0 0.0
    %855 = vmatpush1.msra.mxu0 0.0
    %856 = vmatprep.subr.mxu0 0.0
    %857 = vmatpush1.msra.mxu0 0.0
    %858 = vmatprep.subr.mxu0 0.0
    %859 = vmatpush1.msra.mxu0 0.0
    %860 = vmatprep.subr.mxu0 0.0
    %861 = vmatpush1.msra.mxu0 0.0
    %862 = vmatprep.subr.mxu0 0.0
    %863 = vmatpush1.msra.mxu0 0.0
    %864 = vmatprep.subr.mxu0 0.0
    %865 = vmatpush1.msra.mxu0 0.0
    %866 = vmatprep.subr.mxu0 0.0
    %867 = vmatpush1.msra.mxu0 0.0
    %868 = vmatprep.subr.mxu0 0.0
    %869 = vmatpush1.msra.mxu0 0.0
    %870 = vmatprep.subr.mxu0 0.0
    %871 = vmatpush1.msra.mxu0 0.0
    %872 = vmatprep.subr.mxu0 0.0
    %873 = vmatpush1.msra.mxu0 0.0
    %874 = vmatprep.subr.mxu0 0.0
    %875 = vmatpush1.msra.mxu0 0.0
    %876 = vmatprep.subr.mxu0 0.0
    %877 = vmatpush1.msra.mxu0 0.0
    %878 = vmatprep.subr.mxu0 0.0
    %879 = vmatpush1.msra.mxu0 0.0
    %880 = vmatprep.subr.mxu0 0.0
    %881 = vmatpush1.msra.mxu0 0.0
    %882 = vmatprep.subr.mxu0 0.0
    %883 = vmatpush1.msra.mxu0 0.0
    %884 = vmatprep.subr.mxu0 0.0
    %885 = vmatpush1.msra.mxu0 0.0
    %886 = vmatprep.mubr.f32.mxu0 0.0
    %887 = vmatmul.mubr.f32.gmra.mrb[0].mxu0 %v816
    %v888 = vpop.f32.mrb[0].mxu0
    %v889 = vadd.f32 0.0, %v888
    %v890 = vpop.f32.mrb[0].mxu0
    %891 = vdwg.mxu0
    %vm892 = vcmask 130048
    %v894 = vsel %vm892, %v59, 0
    %896 = vmatprep.subr.mxu0 0.0
    %897 = vmatpush1.msra.mxu0 %v85
    %898 = vmatprep.subr.mxu0 0.0
    %899 = vmatpush1.msra.mxu0 %v86
    %900 = vmatprep.subr.mxu0 0.0
    %901 = vmatpush1.msra.mxu0 0.0
    %902 = vmatprep.subr.mxu0 0.0
    %903 = vmatpush1.msra.mxu0 0.0
    %904 = vmatprep.subr.mxu0 0.0
    %905 = vmatpush1.msra.mxu0 0.0
    %906 = vmatprep.subr.mxu0 0.0
    %907 = vmatpush1.msra.mxu0 0.0
    %908 = vmatprep.subr.mxu0 0.0
    %909 = vmatpush1.msra.mxu0 0.0
    %910 = vmatprep.subr.mxu0 0.0
    %911 = vmatpush1.msra.mxu0 0.0
    %912 = vmatprep.subr.mxu0 0.0
    %913 = vmatpush1.msra.mxu0 0.0
    %914 = vmatprep.subr.mxu0 0.0
    %915 = vmatpush1.msra.mxu0 0.0
    %916 = vmatprep.subr.mxu0 0.0
    %917 = vmatpush1.msra.mxu0 0.0
    %918 = vmatprep.subr.mxu0 0.0
    %919 = vmatpush1.msra.mxu0 0.0
    %920 = vmatprep.subr.mxu0 0.0
    %921 = vmatpush1.msra.mxu0 0.0
    %922 = vmatprep.subr.mxu0 0.0
    %923 = vmatpush1.msra.mxu0 0.0
    %924 = vmatprep.subr.mxu0 0.0
    %925 = vmatpush1.msra.mxu0 0.0
    %926 = vmatprep.subr.mxu0 0.0
    %927 = vmatpush1.msra.mxu0 0.0
    %928 = vmatprep.subr.mxu0 0.0
    %929 = vmatpush1.msra.mxu0 0.0
    %930 = vmatprep.subr.mxu0 0.0
    %931 = vmatpush1.msra.mxu0 0.0
    %932 = vmatprep.subr.mxu0 0.0
    %933 = vmatpush1.msra.mxu0 0.0
    %934 = vmatprep.subr.mxu0 0.0
    %935 = vmatpush1.msra.mxu0 0.0
    %936 = vmatprep.subr.mxu0 0.0
    %937 = vmatpush1.msra.mxu0 0.0
    %938 = vmatprep.subr.mxu0 0.0
    %939 = vmatpush1.msra.mxu0 0.0
    %940 = vmatprep.subr.mxu0 0.0
    %941 = vmatpush1.msra.mxu0 0.0
    %942 = vmatprep.subr.mxu0 0.0
    %943 = vmatpush1.msra.mxu0 0.0
    %944 = vmatprep.subr.mxu0 0.0
    %945 = vmatpush1.msra.mxu0 0.0
    %946 = vmatprep.subr.mxu0 0.0
    %947 = vmatpush1.msra.mxu0 0.0
    %948 = vmatprep.subr.mxu0 0.0
    %949 = vmatpush1.msra.mxu0 0.0
    %950 = vmatprep.subr.mxu0 0.0
    %951 = vmatpush1.msra.mxu0 0.0
    %952 = vmatprep.subr.mxu0 0.0
    %953 = vmatpush1.msra.mxu0 0.0
    %954 = vmatprep.subr.mxu0 0.0
    %955 = vmatpush1.msra.mxu0 0.0
    %956 = vmatprep.subr.mxu0 0.0
    %957 = vmatpush1.msra.mxu0 0.0
    %958 = vmatprep.subr.mxu0 0.0
    %959 = vmatpush1.msra.mxu0 0.0
    %960 = vmatprep.mubr.f32.mxu0 0.0
    %961 = vmatmul.mubr.f32.gmra.mrb[0].mxu0 %v894
    %v962 = vpop.f32.mrb[0].mxu0
    %v963 = vadd.f32 0.0, %v962
    %v964 = vpop.f32.mrb[0].mxu0
    %965 = vdwg.mxu0
    %v967 = vsel %vm99, %v889, 0
    %969 = vmatprep.subr.mxu0 0.0
    %970 = vmatpush1.msra.mxu0 %v81
    %971 = vmatprep.subr.mxu0 0.0
    %972 = vmatpush1.msra.mxu0 %v82
    %973 = vmatprep.subr.mxu0 0.0
    %974 = vmatpush1.msra.mxu0 %v83
    %975 = vmatprep.subr.mxu0 0.0
    %976 = vmatpush1.msra.mxu0 %v84
    %977 = vmatprep.subr.mxu0 0.0
    %978 = vmatpush1.msra.mxu0 0.0
    %979 = vmatprep.subr.mxu0 0.0
    %980 = vmatpush1.msra.mxu0 0.0
    %981 = vmatprep.subr.mxu0 0.0
    %982 = vmatpush1.msra.mxu0 0.0
    %983 = vmatprep.subr.mxu0 0.0
    %984 = vmatpush1.msra.mxu0 0.0
    %985 = vmatprep.subr.mxu0 0.0
    %986 = vmatpush1.msra.mxu0 0.0
    %987 = vmatprep.subr.mxu0 0.0
    %988 = vmatpush1.msra.mxu0 0.0
    %989 = vmatprep.subr.mxu0 0.0
    %990 = vmatpush1.msra.mxu0 0.0
    %991 = vmatprep.subr.mxu0 0.0
    %992 = vmatpush1.msra.mxu0 0.0
    %993 = vmatprep.subr.mxu0 0.0
    %994 = vmatpush1.msra.mxu0 0.0
    %995 = vmatprep.subr.mxu0 0.0
    %996 = vmatpush1.msra.mxu0 0.0
    %997 = vmatprep.subr.mxu0 0.0
    %998 = vmatpush1.msra.mxu0 0.0
    %999 = vmatprep.subr.mxu0 0.0
    %1000 = vmatpush1.msra.mxu0 0.0
    %1001 = vmatprep.subr.mxu0 0.0
    %1002 = vmatpush1.msra.mxu0 0.0
    %1003 = vmatprep.subr.mxu0 0.0
    %1004 = vmatpush1.msra.mxu0 0.0
    %1005 = vmatprep.subr.mxu0 0.0
    %1006 = vmatpush1.msra.mxu0 0.0
    %1007 = vmatprep.subr.mxu0 0.0
    %1008 = vmatpush1.msra.mxu0 0.0
    %1009 = vmatprep.subr.mxu0 0.0
    %1010 = vmatpush1.msra.mxu0 0.0
    %1011 = vmatprep.subr.mxu0 0.0
    %1012 = vmatpush1.msra.mxu0 0.0
    %1013 = vmatprep.subr.mxu0 0.0
    %1014 = vmatpush1.msra.mxu0 0.0
    %1015 = vmatprep.subr.mxu0 0.0
    %1016 = vmatpush1.msra.mxu0 0.0
    %1017 = vmatprep.subr.mxu0 0.0
    %1018 = vmatpush1.msra.mxu0 0.0
    %1019 = vmatprep.subr.mxu0 0.0
    %1020 = vmatpush1.msra.mxu0 0.0
    %1021 = vmatprep.subr.mxu0 0.0
    %1022 = vmatpush1.msra.mxu0 0.0
    %1023 = vmatprep.subr.mxu0 0.0
    %1024 = vmatpush1.msra.mxu0 0.0
    %1025 = vmatprep.subr.mxu0 0.0
    %1026 = vmatpush1.msra.mxu0 0.0
    %1027 = vmatprep.subr.mxu0 0.0
    %1028 = vmatpush1.msra.mxu0 0.0
    %1029 = vmatprep.subr.mxu0 0.0
    %1030 = vmatpush1.msra.mxu0 0.0
    %1031 = vmatprep.subr.mxu0 0.0
    %1032 = vmatpush1.msra.mxu0 0.0
    %1033 = vmatprep.mubr.f32.mxu0 0.0
    %1034 = vmatmul.mubr.f32.gmra.mrb[0].mxu0 %v967
    %v1035 = vpop.f32.mrb[0].mxu0
    %v1036 = vadd.f32 %v963, %v1035
    %v1037 = vpop.f32.mrb[0].mxu0
    %1038 = vdwg.mxu0
    %v1039 = vlaneseq
    %v1040 = vshrl.u32 %v1039, 7
    %v1041 = vsub.s32 0, %v1040
    %v1042 = vrot.slane %v96, %v1041
    %v1043 = vadd.f32 %v1036, %v1042
    %v1044 = vmax.f32 %v1043, 0.0
    %v1045 = vlaneseq
    %v1046 = vshrl.u32 %v1045, 7
    %v1047 = vsub.s32 0, %v1046
    %v1048 = vrot.slane %v97, %v1047
    %v1050 = vsel %vm99, %v1044, 0
    %1052 = vmatprep.subr.mxu0 0.0
    %1053 = vmatpush1.msra.mxu0 %v87
    %1054 = vmatprep.subr.mxu0 0.0
    %1055 = vmatpush1.msra.mxu0 %v88
    %1056 = vmatprep.subr.mxu0 0.0
    %1057 = vmatpush1.msra.mxu0 %v89
    %1058 = vmatprep.subr.mxu0 0.0
    %1059 = vmatpush1.msra.mxu0 %v90
    %1060 = vmatprep.subr.mxu0 0.0
    %1061 = vmatpush1.msra.mxu0 0.0
    %1062 = vmatprep.subr.mxu0 0.0
    %1063 = vmatpush1.msra.mxu0 0.0
    %1064 = vmatprep.subr.mxu0 0.0
    %1065 = vmatpush1.msra.mxu0 0.0
    %1066 = vmatprep.subr.mxu0 0.0
    %1067 = vmatpush1.msra.mxu0 0.0
    %1068 = vmatprep.subr.mxu0 0.0
    %1069 = vmatpush1.msra.mxu0 0.0
    %1070 = vmatprep.subr.mxu0 0.0
    %1071 = vmatpush1.msra.mxu0 0.0
    %1072 = vmatprep.subr.mxu0 0.0
    %1073 = vmatpush1.msra.mxu0 0.0
    %1074 = vmatprep.subr.mxu0 0.0
    %1075 = vmatpush1.msra.mxu0 0.0
    %1076 = vmatprep.subr.mxu0 0.0
    %1077 = vmatpush1.msra.mxu0 0.0
    %1078 = vmatprep.subr.mxu0 0.0
    %1079 = vmatpush1.msra.mxu0 0.0
    %1080 = vmatprep.subr.mxu0 0.0
    %1081 = vmatpush1.msra.mxu0 0.0
    %1082 = vmatprep.subr.mxu0 0.0
    %1083 = vmatpush1.msra.mxu0 0.0
    %1084 = vmatprep.subr.mxu0 0.0
    %1085 = vmatpush1.msra.mxu0 0.0
    %1086 = vmatprep.subr.mxu0 0.0
    %1087 = vmatpush1.msra.mxu0 0.0
    %1088 = vmatprep.subr.mxu0 0.0
    %1089 = vmatpush1.msra.mxu0 0.0
    %1090 = vmatprep.subr.mxu0 0.0
    %1091 = vmatpush1.msra.mxu0 0.0
    %1092 = vmatprep.subr.mxu0 0.0
    %1093 = vmatpush1.msra.mxu0 0.0
    %1094 = vmatprep.subr.mxu0 0.0
    %1095 = vmatpush1.msra.mxu0 0.0
    %1096 = vmatprep.subr.mxu0 0.0
    %1097 = vmatpush1.msra.mxu0 0.0
    %1098 = vmatprep.subr.mxu0 0.0
    %1099 = vmatpush1.msra.mxu0 0.0
    %1100 = vmatprep.subr.mxu0 0.0
    %1101 = vmatpush1.msra.mxu0 0.0
    %1102 = vmatprep.subr.mxu0 0.0
    %1103 = vmatpush1.msra.mxu0 0.0
    %1104 = vmatprep.subr.mxu0 0.0
    %1105 = vmatpush1.msra.mxu0 0.0
    %1106 = vmatprep.subr.mxu0 0.0
    %1107 = vmatpush1.msra.mxu0 0.0
    %1108 = vmatprep.subr.mxu0 0.0
    %1109 = vmatpush1.msra.mxu0 0.0
    %1110 = vmatprep.subr.mxu0 0.0
    %1111 = vmatpush1.msra.mxu0 0.0
    %1112 = vmatprep.subr.mxu0 0.0
    %1113 = vmatpush1.msra.mxu0 0.0
    %1114 = vmatprep.subr.mxu0 0.0
    %1115 = vmatpush1.msra.mxu0 0.0
    %1116 = vmatprep.mubr.f32.mxu0 0.0
    %1117 = vmatmul.mubr.f32.gmra.mrb[0].mxu0 %v1050
    %v1118 = vpop.f32.mrb[0].mxu0
    %v1119 = vadd.f32 %v1048, %v1118
    %v1120 = vpop.f32.mrb[0].mxu0
    %1121 = vdwg.mxu0
    %v1122 = vmax.f32 %v1119, 0.0
    %v1123 = vlaneseq
    %v1124 = vshrl.u32 %v1123, 7
    %v1125 = vsub.s32 0, %v1124
    %v1126 = vrot.slane %v98, %v1125
    %v1128 = vsel %vm99, %v1122, 0
    %1130 = vmatprep.subr.mxu0 0.0
    %1131 = vmatpush1.msra.mxu0 %v91
    %1132 = vmatprep.subr.mxu0 0.0
    %1133 = vmatpush1.msra.mxu0 %v92
    %1134 = vmatprep.subr.mxu0 0.0
    %1135 = vmatpush1.msra.mxu0 %v93
    %1136 = vmatprep.subr.mxu0 0.0
    %1137 = vmatpush1.msra.mxu0 %v94
    %1138 = vmatprep.subr.mxu0 0.0
    %1139 = vmatpush1.msra.mxu0 0.0
    %1140 = vmatprep.subr.mxu0 0.0
    %1141 = vmatpush1.msra.mxu0 0.0
    %1142 = vmatprep.subr.mxu0 0.0
    %1143 = vmatpush1.msra.mxu0 0.0
    %1144 = vmatprep.subr.mxu0 0.0
    %1145 = vmatpush1.msra.mxu0 0.0
    %1146 = vmatprep.subr.mxu0 0.0
    %1147 = vmatpush1.msra.mxu0 0.0
    %1148 = vmatprep.subr.mxu0 0.0
    %1149 = vmatpush1.msra.mxu0 0.0
    %1150 = vmatprep.subr.mxu0 0.0
    %1151 = vmatpush1.msra.mxu0 0.0
    %1152 = vmatprep.subr.mxu0 0.0
    %1153 = vmatpush1.msra.mxu0 0.0
    %1154 = vmatprep.subr.mxu0 0.0
    %1155 = vmatpush1.msra.mxu0 0.0
    %1156 = vmatprep.subr.mxu0 0.0
    %1157 = vmatpush1.msra.mxu0 0.0
    %1158 = vmatprep.subr.mxu0 0.0
    %1159 = vmatpush1.msra.mxu0 0.0
    %1160 = vmatprep.subr.mxu0 0.0
    %1161 = vmatpush1.msra.mxu0 0.0
    %1162 = vmatprep.subr.mxu0 0.0
    %1163 = vmatpush1.msra.mxu0 0.0
    %1164 = vmatprep.subr.mxu0 0.0
    %1165 = vmatpush1.msra.mxu0 0.0
    %1166 = vmatprep.subr.mxu0 0.0
    %1167 = vmatpush1.msra.mxu0 0.0
    %1168 = vmatprep.subr.mxu0 0.0
    %1169 = vmatpush1.msra.mxu0 0.0
    %1170 = vmatprep.subr.mxu0 0.0
    %1171 = vmatpush1.msra.mxu0 0.0
    %1172 = vmatprep.subr.mxu0 0.0
    %1173 = vmatpush1.msra.mxu0 0.0
    %1174 = vmatprep.subr.mxu0 0.0
    %1175 = vmatpush1.msra.mxu0 0.0
    %1176 = vmatprep.subr.mxu0 0.0
    %1177 = vmatpush1.msra.mxu0 0.0
    %1178 = vmatprep.subr.mxu0 0.0
    %1179 = vmatpush1.msra.mxu0 0.0
    %1180 = vmatprep.subr.mxu0 0.0
    %1181 = vmatpush1.msra.mxu0 0.0
    %1182 = vmatprep.subr.mxu0 0.0
    %1183 = vmatpush1.msra.mxu0 0.0
    %1184 = vmatprep.subr.mxu0 0.0
    %1185 = vmatpush1.msra.mxu0 0.0
    %1186 = vmatprep.subr.mxu0 0.0
    %1187 = vmatpush1.msra.mxu0 0.0
    %1188 = vmatprep.subr.mxu0 0.0
    %1189 = vmatpush1.msra.mxu0 0.0
    %1190 = vmatprep.subr.mxu0 0.0
    %1191 = vmatpush1.msra.mxu0 0.0
    %1192 = vmatprep.subr.mxu0 0.0
    %1193 = vmatpush1.msra.mxu0 0.0
    %1194 = vmatprep.mubr.f32.mxu0 0.0
    %1195 = vmatmul.mubr.f32.gmra.mrb[0].mxu0 %v1128
    %v1196 = vpop.f32.mrb[0].mxu0
    %v1197 = vadd.f32 %v1126, %v1196
    %v1198 = vpop.f32.mrb[0].mxu0
    %1199 = vdwg.mxu0
    %1200 = vst [vmem:[#allocation8] sm:$0xff] %v1197
    // Predicated region
    $region26: #{dmpnn_forward_pallas.1} parent=1 // pred_check
      _
    $region27: #{dmpnn_forward_pallas.1} parent=1 // pred_check_branch
      %1202 = sbr.rel (0) target = $region29
    $region28: #{dmpnn_forward_pallas.1} parent=1 // pred_region
      %s1204 = ssub.s32 128, 128
      %1205 = vsyncadd [#allocation4], %s1204
      %s1207 = sshll.u32 [#allocation8], 4
      %s1208 = int_to_ptr.vmem [resolvable:$true] %s1207
      %1210 = dma.vmem_to_hbm [thread:$0]  %s1208, 128, %s3, [#allocation4]
    $region29: #{dmpnn_forward_pallas.1} parent=1 // pred_fallthru
      _
    // Predicated region
    $region30: #{dmpnn_forward_pallas.1} parent=1 // pred_check
      _
    $region31: #{dmpnn_forward_pallas.1} parent=1 // pred_check_branch
      %1212 = sbr.rel (0) target = $region33
    $region32: #{dmpnn_forward_pallas.1} parent=1 // pred_region
      %1213 = dma.done [#allocation4], 128
    $region33: #{dmpnn_forward_pallas.1} parent=1 // pred_fallthru
      _
    %1214 = vsyncpa [#allocation3], 1
    %1215 = vsyncpa [#allocation6], 1
    %1216 = vsyncpa [#allocation4], 1

</llo_original>
